<compile_context>
chip_gen: v7x
topology: tpu7x:2x2x1
jax: 0.10.0
libtpu: 0.0.40
codegen_flags: <defaults>
</compile_context>

<pallas_src>
import functools

import jax
import jax.numpy as jnp
from jax.experimental import pallas as pl
from jax.experimental.pallas import tpu as pltpu


def _flash_attention_kernel(q_ref, k_ref, v_ref, o_ref, m_sc, l_sc, acc_sc, *,
                            scale, mxu_dtype, exp_in_bf16, approx_recip,
                            n_valid, tk):
    """One (batch-block, q-tile, kv-tile) grid step of online-softmax attention."""
    kv = pl.program_id(2)

    @pl.when(kv == 0)
    def _init():
        m_sc[...] = jnp.full(m_sc.shape, -jnp.inf, dtype=m_sc.dtype)
        l_sc[...] = jnp.zeros_like(l_sc)
        acc_sc[...] = jnp.zeros_like(acc_sc)

    q = q_ref[...]   # (bb, tq, D)  native dtype
    k = k_ref[...]   # (bb, tk, D)
    v = v_ref[...]   # (bb, tk, D)

    # Fold the softmax scale into q: bb*tq*D VALU multiplies instead of a
    # bb*tq*tk multiply on the score tile (16x fewer at D=32, tk=512).
    if scale != 1.0:
        q = q * jnp.asarray(scale, dtype=q.dtype)

    # bf16 operands keep the MXU on its native path (f32 matmuls run multi-pass);
    # accumulation stays f32 via preferred_element_type.
    if mxu_dtype is not None and q.dtype != mxu_dtype:
        q = q.astype(mxu_dtype)
        k = k.astype(mxu_dtype)

    # scores = (scale*q) @ k^T: contract D of both operands directly (no
    # materialized k^T copy), f32 accumulation on the MXU.
    s = jnp.einsum("bqd,bkd->bqk", q, k, preferred_element_type=jnp.float32)

    # Ragged N: mask the zero-padded key columns of the last kv tile to -inf so
    # they receive zero softmax weight.
    if n_valid is not None:
        col = kv * tk + jax.lax.broadcasted_iota(jnp.int32, s.shape, dimension=2)
        s = jnp.where(col < n_valid, s, -jnp.inf)

    m_prev = m_sc[...]
    m_new = jnp.maximum(m_prev, jnp.max(s, axis=-1, keepdims=True))
    alpha = jnp.exp(m_prev - m_new)            # rescale factor for previous tiles

    x = s - m_new
    if exp_in_bf16:
        # v6e/v7x bf16 EUP path: ~halves exp push traffic and makes the cast for
        # the PV matmul free. Denominator still accumulates in f32 below.
        p = jnp.exp(x.astype(jnp.bfloat16))
    else:
        p = jnp.exp(x)

    l_sc[...] = alpha * l_sc[...] + jnp.sum(p, axis=-1, keepdims=True,
                                            dtype=jnp.float32)
    pv_dtype = mxu_dtype if mxu_dtype is not None else v.dtype
    acc_sc[...] = alpha * acc_sc[...] + jnp.einsum(
        "bqk,bkd->bqd", p.astype(pv_dtype), v.astype(pv_dtype),
        preferred_element_type=jnp.float32)
    m_sc[...] = m_new

    @pl.when(kv == pl.num_programs(2) - 1)
    def _finalize():
        inv_l = pl.reciprocal(l_sc[...], approx=approx_recip)   # EUP vrcp
        o_ref[...] = (acc_sc[...] * inv_l).astype(o_ref.dtype)


def _pick_tile(n):
    # Prefer 512/256 tiles: keeps the 256-wide MXU of v6e/v7x full; 128 is the
    # floor allowed by the (8, 128) layout constraint (also fine on v5e).
    for t in (512, 256, 128):
        if n >= t and n % t == 0:
            return t
    return n  # n < 128: single full-length tile (block == full array dim is legal)


def _bf16_eup_available():
    # v6e / v7x have a bf16 EUP (exp) path; v5e and older do not.
    try:
        kind = jax.devices()[0].device_kind.lower()
    except Exception:
        return False
    return ("v6" in kind) or ("v7" in kind)


def _vmem_capacity_bytes():
    try:
        return int(pltpu.get_tpu_info().vmem_capacity_bytes)
    except Exception:
        return 64 << 20  # v7x per-TensorCore VMEM: the smallest of current gens


def fusion_attention(q, k, v, qk_scale=1.0, *, fast_math=True):
    """Pallas flash-attention equivalent of Fusion_Attention.forward.

    fast_math=True: bf16 MXU operands (for f32 inputs), bf16 exp on v6e/v7x,
    approximate EUP reciprocal. fast_math=False: full f32 path, exact recip.
    """
    B, N, D = q.shape
    assert k.shape == (B, N, D) and v.shape == (B, N, D)

    # Ragged N: pad the sequence axis to a multiple of 128 and mask the padded
    # key columns in-kernel, keeping score/prob intermediates (tq, tk)-sized
    # instead of (N, N). N < 128 uses one full-length tile unpadded.
    if N % 128 == 0 or N < 128:
        n_pad = N
    else:
        n_pad = ((N + 127) // 128) * 128
    if n_pad != N:
        pad = [(0, 0), (0, n_pad - N), (0, 0)]
        q_in, k_in, v_in = jnp.pad(q, pad), jnp.pad(k, pad), jnp.pad(v, pad)
    else:
        q_in, k_in, v_in = q, k, v

    tq = _pick_tile(n_pad)
    tk = _pick_tile(n_pad)

    itemsize = jnp.dtype(q.dtype).itemsize
    # Tiny sequences: fold part of the batch into each grid step to amortize the
    # ~0.35us/step overhead, but keep the batch grid axis >= 2 so both v7x
    # TensorCores get work from "parallel" megacore sharding.
    if n_pad <= 128 and B > 1 and B * n_pad * D * itemsize <= (4 << 20):
        bb = max(1, B // 2)
        while B % bb != 0:
            bb -= 1
    else:
        bb = 1
    # TODO(synk): for tiny shapes a flattened (B*N, D) QK matmul with a
    # block-diagonal mask would fill the MXU better than the batched einsum.
    # TODO(synk): lane-dense (>=128) output needs head fusion at the caller; the
    # module's (B, N, D) contract with D=32 forces masked stores here.

    grid = (B // bb, n_pad // tq, n_pad // tk)
    kv_steps = n_pad // tk

    fast = bool(fast_math)
    mxu_dtype = jnp.bfloat16 if (fast and q.dtype == jnp.float32) else None
    exp_in_bf16 = fast and _bf16_eup_available()

    # VMEM budget: pipelined q/k/v/o blocks + f32 online-softmax scratch + the
    # (bb, tq, tk) score/prob intermediates (spill headroom), capped
    # generation-aware (v7x only has 64 MiB per TensorCore).
    n_kv_bufs = 3 if kv_steps >= 4 else 2   # deeper k/v pipeline for long N (v5e HBM)
    blk_q = bb * tq * D * itemsize
    blk_kv = bb * tk * D * itemsize
    scratch_bytes = bb * tq * (D + 2) * 4
    interm_bytes = 3 * bb * tq * tk * 4
    est = (2 * blk_q + 2 * n_kv_bufs * blk_kv + 2 * blk_q
           + scratch_bytes + interm_bytes)
    vmem_cap = _vmem_capacity_bytes()
    vmem_limit = int(min(int(0.55 * vmem_cap), max(32 << 20, 2 * est)))

    kv_pipe = {"pipeline_mode": pl.Buffered(3)} if n_kv_bufs == 3 else {}

    kernel = functools.partial(
        _flash_attention_kernel,
        scale=float(qk_scale),
        mxu_dtype=mxu_dtype,
        exp_in_bf16=exp_in_bf16,
        approx_recip=fast,
        n_valid=(N if n_pad != N else None),
        tk=tk,
    )

    out = pl.pallas_call(
        kernel,
        out_shape=jax.ShapeDtypeStruct((B, n_pad, D), q.dtype),
        grid_spec=pltpu.PrefetchScalarGridSpec(
            num_scalar_prefetch=0,
            grid=grid,
            in_specs=[
                pl.BlockSpec((bb, tq, D), lambda b, qi, ki: (b, qi, 0)),             # q
                pl.BlockSpec((bb, tk, D), lambda b, qi, ki: (b, ki, 0), **kv_pipe),  # k
                pl.BlockSpec((bb, tk, D), lambda b, qi, ki: (b, ki, 0), **kv_pipe),  # v
            ],
            out_specs=pl.BlockSpec((bb, tq, D), lambda b, qi, ki: (b, qi, 0)),
            scratch_shapes=[
                pltpu.VMEM((bb, tq, 1), jnp.float32),   # running max  m_i
                pltpu.VMEM((bb, tq, 1), jnp.float32),   # running sum  l_i
                pltpu.VMEM((bb, tq, D), jnp.float32),   # output accumulator
            ],
        ),
        compiler_params=pltpu.CompilerParams(
            dimension_semantics=("parallel", "parallel", "arbitrary"),
            vmem_limit_bytes=vmem_limit,
        ),
    )(q_in, k_in, v_in)

    if n_pad != N:
        out = out[:, :N, :]
    return out


def fusion_attention_ref(q, k, v, qk_scale=1.0):
    attn = jnp.einsum("bnd,bmd->bnm", q * qk_scale, k)
    attn = jax.nn.softmax(attn, axis=-1)
    return jnp.einsum("bnm,bmd->bnd", attn, v)


if __name__ == "__main__":
    key = jax.random.PRNGKey(0)
    kq, kk, kv_key = jax.random.split(key, 3)

    # Small shapes implied by the module: (batch, seq, hidden) = (2, 8, 32).
    B, N, D = 2, 8, 32
    scale = 1.0 / (D ** 0.5)
    q = jax.random.normal(kq, (B, N, D), dtype=jnp.float32)
    k = jax.random.normal(kk, (B, N, D), dtype=jnp.float32)
    v = jax.random.normal(kv_key, (B, N, D), dtype=jnp.float32)

    out = jax.block_until_ready(fusion_attention(q, k, v, qk_scale=scale))
    ref = fusion_attention_ref(q, k, v, qk_scale=scale)
    assert out.shape == (B, N, D)
    # Fast path uses bf16 MXU operands / bf16 exp / approx reciprocal.
    assert jnp.allclose(out, ref, atol=7e-2, rtol=7e-2), "fast-path mismatch"

    # Precise path: f32 matmuls, f32 exp, exact reciprocal.
    out_p = jax.block_until_ready(
        fusion_attention(q, k, v, qk_scale=0.5, fast_math=False))
    ref_p = fusion_attention_ref(q, k, v, qk_scale=0.5)
    assert jnp.allclose(out_p, ref_p, atol=2e-3, rtol=2e-3), "precise-path mismatch"

    # Ragged sequence length: exercises the padded + masked last kv tile.
    N2 = 200
    q2 = jax.random.normal(kq, (B, N2, D), dtype=jnp.float32)
    k2 = jax.random.normal(kk, (B, N2, D), dtype=jnp.float32)
    v2 = jax.random.normal(kv_key, (B, N2, D), dtype=jnp.float32)
    out2 = jax.block_until_ready(fusion_attention(q2, k2, v2, qk_scale=scale))
    ref2 = fusion_attention_ref(q2, k2, v2, qk_scale=scale)
    assert out2.shape == (B, N2, D)
    assert jnp.allclose(out2, ref2, atol=7e-2, rtol=7e-2), "ragged-N mismatch"

    # Multi-kv-tile online softmax + deeper k/v pipelining (kv_steps >= 4).
    N3, D3 = 640, 64
    s3 = 1.0 / (D3 ** 0.5)
    q3 = jax.random.normal(kq, (B, N3, D3), dtype=jnp.float32)
    k3 = jax.random.normal(kk, (B, N3, D3), dtype=jnp.float32)
    v3 = jax.random.normal(kv_key, (B, N3, D3), dtype=jnp.float32)
    out3 = jax.block_until_ready(fusion_attention(q3, k3, v3, qk_scale=s3))
    ref3 = fusion_attention_ref(q3, k3, v3, qk_scale=s3)
    assert jnp.allclose(out3, ref3, atol=7e-2, rtol=7e-2), "multi-tile mismatch"

    print("KERNEL_OK")
</pallas_src>

<mosaic_0001>
module attributes {stable_mosaic.version = 11 : i64} {
  func.func @_flash_attention_kernel(%arg0: i32, %arg1: i32, %arg2: i32, %arg3: memref<1x8x32xf32, #tpu.memory_space<vmem>>, %arg4: memref<1x8x32xf32, #tpu.memory_space<vmem>>, %arg5: memref<1x8x32xf32, #tpu.memory_space<vmem>>, %arg6: memref<1x8x32xf32, #tpu.memory_space<vmem>>, %arg7: memref<1x8x1xf32, #tpu.memory_space<vmem>>, %arg8: memref<1x8x1xf32, #tpu.memory_space<vmem>>, %arg9: memref<1x8x32xf32, #tpu.memory_space<vmem>>) attributes {dimension_semantics = [#tpu.dimension_semantics<parallel>, #tpu.dimension_semantics<parallel>, #tpu.dimension_semantics<arbitrary>], iteration_bounds = array<i64: 2, 1, 1>, scalar_prefetch = 0 : i64, scratch_operands = 3 : i64, tpu.core_type = #tpu.core_type<tc>, window_params = [{transform_indices = @transform_0, window_bounds = array<i64: 1, 8, 32>}, {transform_indices = @transform_1, window_bounds = array<i64: 1, 8, 32>}, {transform_indices = @transform_2, window_bounds = array<i64: 1, 8, 32>}, {transform_indices = @transform_3, window_bounds = array<i64: 1, 8, 32>}]} {
    %c0_i32 = arith.constant 0 : i32
    %0 = arith.cmpi eq, %arg2, %c0_i32 : i32
    %1 = arith.extui %0 : i1 to i32
    %c0_i32_0 = arith.constant 0 : i32
    %2 = arith.cmpi ne, %1, %c0_i32_0 : i32
    scf.if %2 {
      %cst_33 = arith.constant 0xFF800000 : f32
      %38 = vector.broadcast %cst_33 : f32 to vector<1x8x1xf32>
      %c0_34 = arith.constant 0 : index
      %c0_35 = arith.constant 0 : index
      %c0_36 = arith.constant 0 : index
      %39 = vector.load %arg7[%c0_34, %c0_35, %c0_36] : memref<1x8x1xf32, #tpu.memory_space<vmem>>, vector<1x8x1xf32>
      tpu.vector_store %arg7[%c0_34, %c0_35, %c0_36], %38 {strides = array<i32>} : memref<1x8x1xf32, #tpu.memory_space<vmem>>, vector<1x8x1xf32>,
      %cst_37 = arith.constant 0.000000e+00 : f32
      %40 = vector.broadcast %cst_37 : f32 to vector<1x8x1xf32>
      %c0_38 = arith.constant 0 : index
      %c0_39 = arith.constant 0 : index
      %c0_40 = arith.constant 0 : index
      %41 = vector.load %arg8[%c0_38, %c0_39, %c0_40] : memref<1x8x1xf32, #tpu.memory_space<vmem>>, vector<1x8x1xf32>
      tpu.vector_store %arg8[%c0_38, %c0_39, %c0_40], %40 {strides = array<i32>} : memref<1x8x1xf32, #tpu.memory_space<vmem>>, vector<1x8x1xf32>,
      %cst_41 = arith.constant 0.000000e+00 : f32
      %42 = vector.broadcast %cst_41 : f32 to vector<1x8x32xf32>
      %c0_42 = arith.constant 0 : index
      %c0_43 = arith.constant 0 : index
      %c0_44 = arith.constant 0 : index
      %43 = vector.load %arg9[%c0_42, %c0_43, %c0_44] : memref<1x8x32xf32, #tpu.memory_space<vmem>>, vector<1x8x32xf32>
      tpu.vector_store %arg9[%c0_42, %c0_43, %c0_44], %42 {strides = array<i32>} : memref<1x8x32xf32, #tpu.memory_space<vmem>>, vector<1x8x32xf32>,
    } else {
    }
    %c0 = arith.constant 0 : index
    %c0_1 = arith.constant 0 : index
    %c0_2 = arith.constant 0 : index
    %3 = vector.load %arg3[%c0, %c0_1, %c0_2] : memref<1x8x32xf32, #tpu.memory_space<vmem>>, vector<1x8x32xf32>
    %c0_3 = arith.constant 0 : index
    %c0_4 = arith.constant 0 : index
    %c0_5 = arith.constant 0 : index
    %4 = vector.load %arg4[%c0_3, %c0_4, %c0_5] : memref<1x8x32xf32, #tpu.memory_space<vmem>>, vector<1x8x32xf32>
    %c0_6 = arith.constant 0 : index
    %c0_7 = arith.constant 0 : index
    %c0_8 = arith.constant 0 : index
    %5 = vector.load %arg5[%c0_6, %c0_7, %c0_8] : memref<1x8x32xf32, #tpu.memory_space<vmem>>, vector<1x8x32xf32>
    %cst = arith.constant 0.176776692 : f32
    %6 = vector.broadcast %cst : f32 to vector<1x8x32xf32>
    %7 = arith.mulf %3, %6 : vector<1x8x32xf32>
    %8 = arith.truncf %7 : vector<1x8x32xf32> to vector<1x8x32xbf16>
    %9 = arith.truncf %4 : vector<1x8x32xf32> to vector<1x8x32xbf16>
    "tpu.trace_start"() <{level = 10 : i32, message = "bqd,bkd->bqk"}> : () -> ()
    %cst_9 = arith.constant dense<0.000000e+00> : vector<1x8x8xf32>
    %10 = tpu.matmul %8, %9, %cst_9 {dimension_numbers = #tpu.dot_dimension_numbers<[2], [2], [1], [1], [0, 0, 0, 1, 1, 1], [0], [0]>} : vector<1x8x32xbf16>, vector<1x8x32xbf16>, vector<1x8x8xf32> -> vector<1x8x8xf32>
    "tpu.trace_stop"() : () -> ()
    %c0_10 = arith.constant 0 : index
    %c0_11 = arith.constant 0 : index
    %c0_12 = arith.constant 0 : index
    %11 = vector.load %arg7[%c0_10, %c0_11, %c0_12] : memref<1x8x1xf32, #tpu.memory_space<vmem>>, vector<1x8x1xf32>
    %cst_13 = arith.constant dense<0xFF800000> : vector<1x8xf32>
    %12 = vector.multi_reduction <maximumf>, %10, %cst_13 [2] : vector<1x8x8xf32> to vector<1x8xf32>
    %13 = vector.shape_cast %12 : vector<1x8xf32> to vector<1x8x1xf32>
    %14 = arith.maximumf %11, %13 : vector<1x8x1xf32>
    %15 = arith.subf %11, %14 : vector<1x8x1xf32>
    %16 = math.exp %15 : vector<1x8x1xf32>
    %17 = vector.broadcast %14 : vector<1x8x1xf32> to vector<1x8x8xf32>
    %18 = arith.subf %10, %17 : vector<1x8x8xf32>
    %19 = math.exp %18 : vector<1x8x8xf32>
    %c0_14 = arith.constant 0 : index
    %c0_15 = arith.constant 0 : index
    %c0_16 = arith.constant 0 : index
    %20 = vector.load %arg8[%c0_14, %c0_15, %c0_16] : memref<1x8x1xf32, #tpu.memory_space<vmem>>, vector<1x8x1xf32>
    %21 = arith.mulf %16, %20 : vector<1x8x1xf32>
    %cst_17 = arith.constant dense<0.000000e+00> : vector<1x8xf32>
    %22 = vector.multi_reduction <add>, %19, %cst_17 [2] : vector<1x8x8xf32> to vector<1x8xf32>
    %23 = vector.shape_cast %22 : vector<1x8xf32> to vector<1x8x1xf32>
    %24 = arith.addf %21, %23 : vector<1x8x1xf32>
    %c0_18 = arith.constant 0 : index
    %c0_19 = arith.constant 0 : index
    %c0_20 = arith.constant 0 : index
    %25 = vector.load %arg8[%c0_18, %c0_19, %c0_20] : memref<1x8x1xf32, #tpu.memory_space<vmem>>, vector<1x8x1xf32>
    tpu.vector_store %arg8[%c0_18, %c0_19, %c0_20], %24 {strides = array<i32>} : memref<1x8x1xf32, #tpu.memory_space<vmem>>, vector<1x8x1xf32>,
    %c0_21 = arith.constant 0 : index
    %c0_22 = arith.constant 0 : index
    %c0_23 = arith.constant 0 : index
    %26 = vector.load %arg9[%c0_21, %c0_22, %c0_23] : memref<1x8x32xf32, #tpu.memory_space<vmem>>, vector<1x8x32xf32>
    %27 = vector.broadcast %16 : vector<1x8x1xf32> to vector<1x8x32xf32>
    %28 = arith.mulf %27, %26 : vector<1x8x32xf32>
    %29 = arith.truncf %19 : vector<1x8x8xf32> to vector<1x8x8xbf16>
    %30 = arith.truncf %5 : vector<1x8x32xf32> to vector<1x8x32xbf16>
    "tpu.trace_start"() <{level = 10 : i32, message = "bqk,bkd->bqd"}> : () -> ()
    %cst_24 = arith.constant dense<0.000000e+00> : vector<1x8x32xf32>
    %31 = tpu.matmul %29, %30, %cst_24 {dimension_numbers = #tpu.dot_dimension_numbers<[2], [1], [1], [2], [0, 0, 0, 1, 1, 2], [0], [0]>} : vector<1x8x8xbf16>, vector<1x8x32xbf16>, vector<1x8x32xf32> -> vector<1x8x32xf32>
    "tpu.trace_stop"() : () -> ()
    %32 = arith.addf %28, %31 : vector<1x8x32xf32>
    %c0_25 = arith.constant 0 : index
    %c0_26 = arith.constant 0 : index
    %c0_27 = arith.constant 0 : index
    %33 = vector.load %arg9[%c0_25, %c0_26, %c0_27] : memref<1x8x32xf32, #tpu.memory_space<vmem>>, vector<1x8x32xf32>
    tpu.vector_store %arg9[%c0_25, %c0_26, %c0_27], %32 {strides = array<i32>} : memref<1x8x32xf32, #tpu.memory_space<vmem>>, vector<1x8x32xf32>,
    %c0_28 = arith.constant 0 : index
    %c0_29 = arith.constant 0 : index
    %c0_30 = arith.constant 0 : index
    %34 = vector.load %arg7[%c0_28, %c0_29, %c0_30] : memref<1x8x1xf32, #tpu.memory_space<vmem>>, vector<1x8x1xf32>
    tpu.vector_store %arg7[%c0_28, %c0_29, %c0_30], %14 {strides = array<i32>} : memref<1x8x1xf32, #tpu.memory_space<vmem>>, vector<1x8x1xf32>,
    %c0_i32_31 = arith.constant 0 : i32
    %35 = arith.cmpi eq, %arg2, %c0_i32_31 : i32
    %36 = arith.extui %35 : i1 to i32
    %c0_i32_32 = arith.constant 0 : i32
    %37 = arith.cmpi ne, %36, %c0_i32_32 : i32
    scf.if %37 {
      %c0_33 = arith.constant 0 : index
      %c0_34 = arith.constant 0 : index
      %c0_35 = arith.constant 0 : index
      %38 = vector.load %arg8[%c0_33, %c0_34, %c0_35] : memref<1x8x1xf32, #tpu.memory_space<vmem>>, vector<1x8x1xf32>
      %39 = tpu.reciprocal %38 {approx = true} : vector<1x8x1xf32> -> vector<1x8x1xf32>
      %c0_36 = arith.constant 0 : index
      %c0_37 = arith.constant 0 : index
      %c0_38 = arith.constant 0 : index
      %40 = vector.load %arg9[%c0_36, %c0_37, %c0_38] : memref<1x8x32xf32, #tpu.memory_space<vmem>>, vector<1x8x32xf32>
      %41 = vector.broadcast %39 : vector<1x8x1xf32> to vector<1x8x32xf32>
      %42 = arith.mulf %40, %41 : vector<1x8x32xf32>
      %c0_39 = arith.constant 0 : index
      %c0_40 = arith.constant 0 : index
      %c0_41 = arith.constant 0 : index
      %43 = vector.load %arg6[%c0_39, %c0_40, %c0_41] : memref<1x8x32xf32, #tpu.memory_space<vmem>>, vector<1x8x32xf32>
      tpu.vector_store %arg6[%c0_39, %c0_40, %c0_41], %42 {strides = array<i32>} : memref<1x8x32xf32, #tpu.memory_space<vmem>>, vector<1x8x32xf32>,
    } else {
    }
    return
  }
  func.func @transform_0(%arg0: i32, %arg1: i32, %arg2: i32) -> (i32, i32, i32) {
    %c0_i32 = arith.constant 0 : i32
    %c0_i32_0 = arith.constant 0 : i32
    return %arg0, %arg1, %c0_i32 : i32, i32, i32
  }
  func.func @transform_1(%arg0: i32, %arg1: i32, %arg2: i32) -> (i32, i32, i32) {
    %c0_i32 = arith.constant 0 : i32
    %c0_i32_0 = arith.constant 0 : i32
    return %arg0, %arg2, %c0_i32 : i32, i32, i32
  }
  func.func @transform_2(%arg0: i32, %arg1: i32, %arg2: i32) -> (i32, i32, i32) {
    %c0_i32 = arith.constant 0 : i32
    %c0_i32_0 = arith.constant 0 : i32
    return %arg0, %arg2, %c0_i32 : i32, i32, i32
  }
  func.func @transform_3(%arg0: i32, %arg1: i32, %arg2: i32) -> (i32, i32, i32) {
    %c0_i32 = arith.constant 0 : i32
    %c0_i32_0 = arith.constant 0 : i32
    return %arg0, %arg1, %c0_i32 : i32, i32, i32
  }
}

</mosaic_0001>

<llo_original>
// kernel: tpu_custom_call.1
$region0: #{tpu_custom_call.1}
  #allocation0 [shape = 'u32[]', space=smem, size = 0x4, offset = 0x4, fixed_abs, tag = 'smem constant byte address 0x4 - core index']
  #allocation1 [shape = 'u32[144,128]{1,0:T(1,128)}', space=vmem, size = 0x12000, scoped, tag = 'internal scratch']
  #allocation2 [shape = 'f32[1,8,1]{2,1,0:T(8,128)}', space=vmem, size = 0x1000, scoped, tag = 'scratch operand']
  #allocation3 [shape = 'f32[1,8,1]{2,1,0:T(8,128)}', space=vmem, size = 0x1000, scoped, tag = 'scratch operand']
  #allocation4 [shape = 'f32[1,8,32]{2,1,0:T(8,128)}', space=vmem, size = 0x1000, scoped, tag = 'scratch operand']
  %s0 = inlined_call_operand.hbm [shape: f32[2,8,32], index: 0, kind: input, shape index: {}]
  %s1 = inlined_call_operand.hbm [shape: f32[2,8,32], index: 1, kind: input, shape index: {}]
  %s2 = inlined_call_operand.hbm [shape: f32[2,8,32], index: 2, kind: input, shape index: {}]
  %s3 = inlined_call_operand.hbm [shape: f32[2,8,32], index: 3, kind: output, shape index: {}]
  %s4 = sld [smem:[#allocation0]]
  $region65: #{tpu_custom_call.1} parent=0
    _
  %s6 = ssub.s32 1, %s4
  %s7 = scalar_select 0, %s6, %s4
  $region1: #{tpu_custom_call.1} parent=0
    #allocation5 [shape = 'u8[8192]{0}', space=vmem, size = 0x2000, scoped, tag = 'input window, operand 0']
    #allocation6 [shape = 's32[2]{0}', space=sflag, size = 0x8, scoped, tag = 'scoped memory for tpu_custom_call.1']
    #allocation7 [shape = 's32[2]{0}', space=sflag, size = 0x8, scoped, tag = 'scoped memory for tpu_custom_call.1']
    #allocation8 [shape = 'u8[8192]{0}', space=vmem, size = 0x2000, scoped, tag = 'input window, operand 1']
    #allocation9 [shape = 's32[2]{0}', space=sflag, size = 0x8, scoped, tag = 'scoped memory for tpu_custom_call.1']
    #allocation10 [shape = 'u8[8192]{0}', space=vmem, size = 0x2000, scoped, tag = 'input window, operand 2']
    #allocation11 [shape = 'u8[8192]{0}', space=vmem, size = 0x2000, scoped, tag = 'output window, operand 0']
    %8 = vsyncpa [#allocation6], 0
    %s9 = scalar_lea.sflag [#allocation6], 1
    %10 = vsyncpa %s9, 0
    %11 = vsyncpa [#allocation9], 0
    %s12 = scalar_lea.sflag [#allocation9], 1
    %13 = vsyncpa %s12, 0
    %14 = vsyncpa [#allocation7], 0
    %s15 = scalar_lea.sflag [#allocation7], 1
    %16 = vsyncpa %s15, 0
    loop: start=0, step=1, limit=4
    $region2: #{tpu_custom_call.1} parent=1 // loop_pre_header
      _
    $region3: #{tpu_custom_call.1} parent=1 // loop_header
      %s18 = sphi 0, %s22
      %p19 = scmp.ge.s32.totalorder %s18, 4
      %s25 = sphi 0, %s44
      %s26 = sphi 0, %s40
      %s27 = sphi 0, %s36
      %s28 = sphi 0, %s25
      %s29 = sphi 0, %s26
      %s30 = sphi 0, %s27
      %s31 = sphi 0, %s28
      %s32 = sphi 0, %s29
      %s33 = sphi 0, %s30
      %s49 = sphi 0, %s51
      %s52 = sphi 0, %s49
      %s53 = sphi 0, %s52
      %s69 = sphi 0, %s53
      %s77 = sphi 0, %s79
      %s80 = sphi 0, %s77
      %s81 = sphi 0, %s80
      %s97 = sphi 0, %s81
      %s105 = sphi 0, %s107
      %s108 = sphi 0, %s105
      %s109 = sphi 0, %s108
      %s125 = sphi 0, %s109
      %s133 = sphi 0, %s135
      %s136 = sphi 0, %s133
      %s137 = sphi 0, %s136
      %s153 = sphi 0, %s137
    $region4: #{tpu_custom_call.1} parent=1 // loop_header_branch
      %21 = sbr.rel (%p19) target = $region8
    $region5: #{tpu_custom_call.1} parent=1 // loop_body
      %s23 = ssub.s32 %s18, 1
      %s24 = ssub.s32 %s18, 2
      %s34 = sadd.s32 1, %s27
      %p35 = scmp.ge.s32.totalorder %s34, 1
      %s36 = scalar_select %p35, 0, %s34
      %s37 = sadd.s32 1, %s26
      %s38 = scalar_select %p35, %s37, %s26
      %p39 = scmp.ge.s32.totalorder %s38, 1
      %s40 = scalar_select %p39, 0, %s38
      %s41 = sadd.s32 1, %s25
      %s42 = scalar_select %p39, %s41, %s25
      %p43 = scmp.ge.s32.totalorder %s42, 2
      %s44 = scalar_select %p43, 0, %s42
      %s45 = ssub.s32 %s25, %s44
      %s46 = ssub.s32 %s26, %s40
      %s47 = sor.u32 %s45, %s46
      %p48 = scmp.eq.s32.totalorder %s47, 0
      %s50 = sadd.s32 %s49, 1
      %s51 = scalar_select %p48, %s49, %s50
      %p54 = pneg %p48
      %p55 = scmp.eq.s32.totalorder %s18, 1
      %p56 = por %p54, %p55
      %p57 = scmp.ne.s32.totalorder %s49, %s52
      %p58 = scmp.eq.s32.totalorder %s18, 0
      %p59 = por %p57, %p58
      %p60 = scmp.ne.s32.totalorder %s49, %s52
      %p61 = scmp.eq.s32.totalorder %s23, 1
      %p62 = por %p60, %p61
      %p63 = scmp.ne.s32.totalorder %s52, %s53
      %p64 = scmp.eq.s32.totalorder %s23, 0
      %p65 = por %p63, %p64
      %p66 = scmp.ne.s32.totalorder %s52, %s53
      %p67 = scmp.eq.s32.totalorder %s24, 1
      %p68 = por %p66, %p67
      %p70 = scmp.ne.s32.totalorder %s53, %s69
      %p71 = scmp.eq.s32.totalorder %s24, 0
      %p72 = por %p70, %p71
      %s73 = ssub.s32 %s25, %s44
      %s74 = ssub.s32 %s27, %s36
      %s75 = sor.u32 %s73, %s74
      %p76 = scmp.eq.s32.totalorder %s75, 0
      %s78 = sadd.s32 %s77, 1
      %s79 = scalar_select %p76, %s77, %s78
      %p82 = pneg %p76
      %p83 = scmp.eq.s32.totalorder %s18, 1
      %p84 = por %p82, %p83
      %p85 = scmp.ne.s32.totalorder %s77, %s80
      %p86 = scmp.eq.s32.totalorder %s18, 0
      %p87 = por %p85, %p86
      %p88 = scmp.ne.s32.totalorder %s77, %s80
      %p89 = scmp.eq.s32.totalorder %s23, 1
      %p90 = por %p88, %p89
      %p91 = scmp.ne.s32.totalorder %s80, %s81
      %p92 = scmp.eq.s32.totalorder %s23, 0
      %p93 = por %p91, %p92
      %p94 = scmp.ne.s32.totalorder %s80, %s81
      %p95 = scmp.eq.s32.totalorder %s24, 1
      %p96 = por %p94, %p95
      %p98 = scmp.ne.s32.totalorder %s81, %s97
      %p99 = scmp.eq.s32.totalorder %s24, 0
      %p100 = por %p98, %p99
      %s101 = ssub.s32 %s25, %s44
      %s102 = ssub.s32 %s27, %s36
      %s103 = sor.u32 %s101, %s102
      %p104 = scmp.eq.s32.totalorder %s103, 0
      %s106 = sadd.s32 %s105, 1
      %s107 = scalar_select %p104, %s105, %s106
      %p110 = pneg %p104
      %p111 = scmp.eq.s32.totalorder %s18, 1
      %p112 = por %p110, %p111
      %p113 = scmp.ne.s32.totalorder %s105, %s108
      %p114 = scmp.eq.s32.totalorder %s18, 0
      %p115 = por %p113, %p114
      %p116 = scmp.ne.s32.totalorder %s105, %s108
      %p117 = scmp.eq.s32.totalorder %s23, 1
      %p118 = por %p116, %p117
      %p119 = scmp.ne.s32.totalorder %s108, %s109
      %p120 = scmp.eq.s32.totalorder %s23, 0
      %p121 = por %p119, %p120
      %p122 = scmp.ne.s32.totalorder %s108, %s109
      %p123 = scmp.eq.s32.totalorder %s24, 1
      %p124 = por %p122, %p123
      %p126 = scmp.ne.s32.totalorder %s109, %s125
      %p127 = scmp.eq.s32.totalorder %s24, 0
      %p128 = por %p126, %p127
      %s129 = ssub.s32 %s25, %s44
      %s130 = ssub.s32 %s26, %s40
      %s131 = sor.u32 %s129, %s130
      %p132 = scmp.eq.s32.totalorder %s131, 0
      %s134 = sadd.s32 %s133, 1
      %s135 = scalar_select %p132, %s133, %s134
      %p138 = pneg %p132
      %p139 = scmp.eq.s32.totalorder %s18, 1
      %p140 = por %p138, %p139
      %p141 = scmp.ne.s32.totalorder %s133, %s136
      %p142 = scmp.eq.s32.totalorder %s18, 0
      %p143 = por %p141, %p142
      %p144 = scmp.ne.s32.totalorder %s133, %s136
      %p145 = scmp.eq.s32.totalorder %s23, 1
      %p146 = por %p144, %p145
      %p147 = scmp.ne.s32.totalorder %s136, %s137
      %p148 = scmp.eq.s32.totalorder %s23, 0
      %p149 = por %p147, %p148
      %p150 = scmp.ne.s32.totalorder %s136, %s137
      %p151 = scmp.eq.s32.totalorder %s24, 1
      %p152 = por %p150, %p151
      %p154 = scmp.ne.s32.totalorder %s137, %s153
      %p155 = scmp.eq.s32.totalorder %s24, 0
      %p156 = por %p154, %p155
      %p157 = scmp.le.s32.totalorder 1, %s18
      %p158 = scmp.lt.s32.totalorder %s18, 3
      %p159 = pnand %p157, %p158
      %p160 = pneg %p159
      // Predicated region
      $region9: #{tpu_custom_call.1} parent=5 // pred_check
        _
      $region10: #{tpu_custom_call.1} parent=5 // pred_check_branch
        %162 = sbr.rel (%p159) target = $region12
      $region11: #{tpu_custom_call.1} parent=5 // pred_region
        %s163 = ssub.s32 %s18, 1
      $region12: #{tpu_custom_call.1} parent=5 // pred_fallthru
        _
      %p164 = scmp.lt.s32.totalorder %s18, 2
      // Predicated region
      $region13: #{tpu_custom_call.1} parent=5 // pred_check
        %p165 = pneg %p164
      $region14: #{tpu_custom_call.1} parent=5 // pred_check_branch
        %167 = sbr.rel (%p165) target = $region16
      $region15: #{tpu_custom_call.1} parent=5 // pred_region
        // Predicated region
        $region17: #{tpu_custom_call.1} parent=15 // pred_check
          %p168 = pneg %p59
        $region18: #{tpu_custom_call.1} parent=15 // pred_check_branch
          %170 = sbr.rel (%p168) target = $region20
        $region19: #{tpu_custom_call.1} parent=15 // pred_region
          %s171 = sand.u32 %s49, 1
          %s172 = scalar_lea.sflag [#allocation6], %s171
          %s173 = sand.u32 %s49, 1
          %s174 = smul.addr %s173, 8
          %s175 = scalar_lea.vmem [#allocation5], %s174
          %s177 = ssub.s32 128, 128
          %178 = vsyncadd %s172, %s177
          %s179 = sadd.s32 %s26, %s25
          %s180 = smul.addr %s179, 128
          %s181 = scalar_lea.hbm %s0, %s180
          %s183 = sshll.u32 %s175, 4
          %s184 = int_to_ptr.vmem [resolvable:$true] %s183
          %186 = dma.hbm_to_vmem [thread:$0]  %s181, 128, %s184, %s172
        $region20: #{tpu_custom_call.1} parent=15 // pred_fallthru
          _
        // Predicated region
        $region21: #{tpu_custom_call.1} parent=15 // pred_check
          %p187 = pneg %p87
        $region22: #{tpu_custom_call.1} parent=15 // pred_check_branch
          %189 = sbr.rel (%p187) target = $region24
        $region23: #{tpu_custom_call.1} parent=15 // pred_region
          %s190 = sand.u32 %s18, 1
          %s191 = scalar_lea.sflag [#allocation9], %s190
          %s192 = sand.u32 %s77, 1
          %s193 = smul.addr %s192, 8
          %s194 = scalar_lea.vmem [#allocation8], %s193
          %s196 = ssub.s32 128, 128
          %197 = vsyncadd %s191, %s196
          %s198 = sadd.s32 %s27, %s25
          %s199 = smul.addr %s198, 128
          %s200 = scalar_lea.hbm %s1, %s199
          %s202 = sshll.u32 %s194, 4
          %s203 = int_to_ptr.vmem [resolvable:$true] %s202
          %205 = dma.hbm_to_vmem [thread:$0]  %s200, 128, %s203, %s191
        $region24: #{tpu_custom_call.1} parent=15 // pred_fallthru
          _
        // Predicated region
        $region25: #{tpu_custom_call.1} parent=15 // pred_check
          %p206 = pneg %p115
        $region26: #{tpu_custom_call.1} parent=15 // pred_check_branch
          %208 = sbr.rel (%p206) target = $region28
        $region27: #{tpu_custom_call.1} parent=15 // pred_region
          %s209 = sand.u32 %s18, 1
          %s210 = scalar_lea.sflag [#allocation9], %s209
          %s211 = sand.u32 %s105, 1
          %s212 = smul.addr %s211, 8
          %s213 = scalar_lea.vmem [#allocation10], %s212
          %s215 = ssub.s32 128, 128
          %216 = vsyncadd %s210, %s215
          %s217 = sadd.s32 %s27, %s25
          %s218 = smul.addr %s217, 128
          %s219 = scalar_lea.hbm %s2, %s218
          %s221 = sshll.u32 %s213, 4
          %s222 = int_to_ptr.vmem [resolvable:$true] %s221
          %224 = dma.hbm_to_vmem [thread:$0]  %s219, 128, %s222, %s210
        $region28: #{tpu_custom_call.1} parent=15 // pred_fallthru
          _
      $region16: #{tpu_custom_call.1} parent=5 // pred_fallthru
        _
      %p225 = scmp.le.s32.totalorder 1, %s18
      %p226 = scmp.lt.s32.totalorder %s18, 3
      %p227 = pnand %p225, %p226
      %p228 = pneg %p227
      // Predicated region
      $region29: #{tpu_custom_call.1} parent=5 // pred_check
        _
      $region30: #{tpu_custom_call.1} parent=5 // pred_check_branch
        %230 = sbr.rel (%p227) target = $region32
      $region31: #{tpu_custom_call.1} parent=5 // pred_region
        %s231 = ssub.s32 %s18, 1
        %s232 = sand.u32 %s52, 1
        %s233 = scalar_lea.sflag [#allocation6], %s232
        %s234 = sand.u32 %s52, 1
        %s235 = smul.addr %s234, 8
        %s236 = scalar_lea.vmem [#allocation5], %s235
        // Predicated region
        $region33: #{tpu_custom_call.1} parent=31 // pred_check
          %p237 = pneg %p65
        $region34: #{tpu_custom_call.1} parent=31 // pred_check_branch
          %239 = sbr.rel (%p237) target = $region36
        $region35: #{tpu_custom_call.1} parent=31 // pred_region
          %240 = dma.done %s233, 128
        $region36: #{tpu_custom_call.1} parent=31 // pred_fallthru
          _
        %s241 = sand.u32 %s23, 1
        %s242 = scalar_lea.sflag [#allocation9], %s241
        %s243 = sand.u32 %s80, 1
        %s244 = smul.addr %s243, 8
        %s245 = scalar_lea.vmem [#allocation8], %s244
        // Predicated region
        $region37: #{tpu_custom_call.1} parent=31 // pred_check
          %p246 = pneg %p93
        $region38: #{tpu_custom_call.1} parent=31 // pred_check_branch
          %248 = sbr.rel (%p246) target = $region40
        $region39: #{tpu_custom_call.1} parent=31 // pred_region
          %249 = dma.done %s242, 128
        $region40: #{tpu_custom_call.1} parent=31 // pred_fallthru
          _
        %s250 = sand.u32 %s23, 1
        %s251 = scalar_lea.sflag [#allocation9], %s250
        %s252 = sand.u32 %s108, 1
        %s253 = smul.addr %s252, 8
        %s254 = scalar_lea.vmem [#allocation10], %s253
        // Predicated region
        $region41: #{tpu_custom_call.1} parent=31 // pred_check
          %p255 = pneg %p121
        $region42: #{tpu_custom_call.1} parent=31 // pred_check_branch
          %257 = sbr.rel (%p255) target = $region44
        $region43: #{tpu_custom_call.1} parent=31 // pred_region
          %258 = dma.done %s251, 128
        $region44: #{tpu_custom_call.1} parent=31 // pred_fallthru
          _
        %s259 = sand.u32 %s52, 1
        %s260 = scalar_lea.sflag [#allocation6], %s259
        %s261 = sand.u32 %s52, 1
        %s262 = smul.addr %s261, 8
        %s263 = scalar_lea.vmem [#allocation5], %s262
        %p264 = pneg %p65
        %p265 = pneg %p62
        %s266 = sand.u32 %s23, 1
        %s267 = scalar_lea.sflag [#allocation9], %s266
        %s268 = sand.u32 %s80, 1
        %s269 = smul.addr %s268, 8
        %s270 = scalar_lea.vmem [#allocation8], %s269
        %p271 = pneg %p93
        %p272 = pneg %p90
        %s273 = sand.u32 %s23, 1
        %s274 = scalar_lea.sflag [#allocation9], %s273
        %s275 = sand.u32 %s108, 1
        %s276 = smul.addr %s275, 8
        %s277 = scalar_lea.vmem [#allocation10], %s276
        %p278 = pneg %p121
        %p279 = pneg %p118
        %p280 = pneg %p149
        %p281 = pneg %p146
        %s282 = sand.u32 %s136, 1
        %s283 = scalar_lea.sflag [#allocation7], %s282
        %s284 = sand.u32 %s136, 1
        %s285 = smul.addr %s284, 8
        %s286 = scalar_lea.vmem [#allocation11], %s285
        %p288 = scmp.eq.s32.totalorder %s30, 0
        // Predicated region
        $region45: #{tpu_custom_call.1} parent=31 // pred_check
          %p289 = pneg %p288
        $region46: #{tpu_custom_call.1} parent=31 // pred_check_branch
          %291 = sbr.rel (%p289) target = $region48
        $region47: #{tpu_custom_call.1} parent=31 // pred_region
          %vm292 = vcmask 7168
          %293 = vst.msk [vmem:[#allocation2] sm:$0xff] %vm292, -inf
          %294 = vst.msk [vmem:[#allocation3] sm:$0xff] %vm292, 0.0
          %vm295 = vcmask 261120
          %296 = vst.msk [vmem:[#allocation4] sm:$0xff] %vm295, 0.0
        $region48: #{tpu_custom_call.1} parent=31 // pred_fallthru
          _
        %v297 = vld [vmem:[%s236] sm:$0xff]
        %v298 = vld [vmem:[%s245] sm:$0xff]
        %v299 = vld [vmem:[%s254] sm:$0xff]
        %v300 = vmul.f32 %v297, 0.17677669
        %v301 = vpack.c.bf16 %v300, %v300
        %v302 = vpack.c.bf16 %v298, %v298
        %vm303 = vcmask 261120
        %v305 = vsel %vm303, %v301, 0
        %v308 = vsel %vm303, %v302, 0
        %310 = vmatprep.subr.bf16.mxu0 0
        %311 = vmatpush1.bf16.xpose.msra.mxu0 %v308
        %312 = vmatprep.subr.bf16.mxu0 0
        %313 = vmatpush1.bf16.xpose.msra.mxu0 0
        %314 = vmatprep.subr.bf16.mxu0 0
        %315 = vmatpush1.bf16.xpose.msra.mxu0 0
        %316 = vmatprep.subr.bf16.mxu0 0
        %317 = vmatpush1.bf16.xpose.msra.mxu0 0
        %318 = vmatprep.subr.bf16.mxu0 0
        %319 = vmatpush1.bf16.xpose.msra.mxu0 0
        %320 = vmatprep.subr.bf16.mxu0 0
        %321 = vmatpush1.bf16.xpose.msra.mxu0 0
        %322 = vmatprep.subr.bf16.mxu0 0
        %323 = vmatpush1.bf16.xpose.msra.mxu0 0
        %324 = vmatprep.subr.bf16.mxu0 0
        %325 = vmatpush1.bf16.xpose.msra.mxu0 0
        %326 = vmatprep.subr.bf16.mxu0 0
        %327 = vmatpush1.bf16.xpose.msra.mxu0 0
        %328 = vmatprep.subr.bf16.mxu0 0
        %329 = vmatpush1.bf16.xpose.msra.mxu0 0
        %330 = vmatprep.subr.bf16.mxu0 0
        %331 = vmatpush1.bf16.xpose.msra.mxu0 0
        %332 = vmatprep.subr.bf16.mxu0 0
        %333 = vmatpush1.bf16.xpose.msra.mxu0 0
        %334 = vmatprep.subr.bf16.mxu0 0
        %335 = vmatpush1.bf16.xpose.msra.mxu0 0
        %336 = vmatprep.subr.bf16.mxu0 0
        %337 = vmatpush1.bf16.xpose.msra.mxu0 0
        %338 = vmatprep.subr.bf16.mxu0 0
        %339 = vmatpush1.bf16.xpose.msra.mxu0 0
        %340 = vmatprep.subr.bf16.mxu0 0
        %341 = vmatpush1.bf16.xpose.msra.mxu0 0
        %342 = vmatprep.mubr.bf16.mxu0 0
        %343 = vmatmul.mubr.bf16.gmra.mrb[0].mxu0 %v305
        %v344 = vpop.f32.mrb[0].mxu0
        %v345 = vadd.f32 0.0, %v344
        %v346 = vpop.f32.mrb[0].mxu0
        %v347 = vpop.f32.mrb[0].mxu0
        %v348 = vpop.f32.mrb[0].mxu0
        %349 = vdwg.mxu0
        %v350 = vld [vmem:[#allocation2] sm:$0xff]
        %vm351 = vcmask 64512
        %v352 = vsel %vm351, %v345, -inf
        %353 = vmax.xlane.f32.xlu0 %v352
        %v354 = vpop.xlane.xlu0 %353
        %v355 = vmax.f32 %v350, %v354
        %v356 = vsub.f32 %v350, %v355
        %v357 = vmul.f32 %v356, 1.442695
        %v358 = vpow.pop %v357
        %360 = vset.pattern.permute.xlu0 0
        %361 = vperm.xlu0 %360, %v355
        %v362 = vpop.permute.xlu0 %361
        %v364 = vsub.f32 %v345, %v362
        %v365 = vmul.f32 %v364, 1.442695
        %v366 = vpow.pop %v365
        %v367 = vld [vmem:[#allocation3] sm:$0xff]
        %v368 = vmul.f32 %v358, %v367
        %v369 = vsel %vm351, %v366, 0.0
        %370 = vadd.xlane.f32.xlu0 %v369
        %v371 = vpop.xlane.xlu0 %370
        %v372 = vadd.f32 %v368, %v371
        %vm373 = vcmask 7168
        %374 = vst.msk [vmem:[#allocation3] sm:$0xff] %vm373, %v372
        %v375 = vld [vmem:[#allocation4] sm:$0xff]
        %377 = vset.pattern.permute.xlu0 0
        %378 = vperm.xlu0 %377, %v358
        %v379 = vpop.permute.xlu0 %378
        %v381 = vmul.f32 %v379, %v375
        %v382 = vpack.c.bf16 %v366, %v366
        %v383 = vpack.c.bf16 %v299, %v299
        %v385 = vsel %vm351, %v382, 0
        %vm387 = vcmask 1043456
        %v389 = vsel %vm387, %v383, 0
        %391 = vmatprep.subr.bf16.mxu0 0
        %392 = vmatpush1.bf16.msra.mxu0 %v389
        %393 = vmatprep.subr.bf16.mxu0 0
        %394 = vmatpush1.bf16.msra.mxu0 0
        %395 = vmatprep.subr.bf16.mxu0 0
        %396 = vmatpush1.bf16.msra.mxu0 0
        %397 = vmatprep.subr.bf16.mxu0 0
        %398 = vmatpush1.bf16.msra.mxu0 0
        %399 = vmatprep.subr.bf16.mxu0 0
        %400 = vmatpush1.bf16.msra.mxu0 0
        %401 = vmatprep.subr.bf16.mxu0 0
        %402 = vmatpush1.bf16.msra.mxu0 0
        %403 = vmatprep.subr.bf16.mxu0 0
        %404 = vmatpush1.bf16.msra.mxu0 0
        %405 = vmatprep.subr.bf16.mxu0 0
        %406 = vmatpush1.bf16.msra.mxu0 0
        %407 = vmatprep.subr.bf16.mxu0 0
        %408 = vmatpush1.bf16.msra.mxu0 0
        %409 = vmatprep.subr.bf16.mxu0 0
        %410 = vmatpush1.bf16.msra.mxu0 0
        %411 = vmatprep.subr.bf16.mxu0 0
        %412 = vmatpush1.bf16.msra.mxu0 0
        %413 = vmatprep.subr.bf16.mxu0 0
        %414 = vmatpush1.bf16.msra.mxu0 0
        %415 = vmatprep.subr.bf16.mxu0 0
        %416 = vmatpush1.bf16.msra.mxu0 0
        %417 = vmatprep.subr.bf16.mxu0 0
        %418 = vmatpush1.bf16.msra.mxu0 0
        %419 = vmatprep.subr.bf16.mxu0 0
        %420 = vmatpush1.bf16.msra.mxu0 0
        %421 = vmatprep.subr.bf16.mxu0 0
        %422 = vmatpush1.bf16.msra.mxu0 0
        %423 = vmatprep.mubr.bf16.mxu0 0
        %424 = vmatmul.mubr.bf16.gmra.mrb[0].mxu0 %v385
        %v425 = vpop.f32.mrb[0].mxu0
        %v426 = vadd.f32 0.0, %v425
        %v427 = vpop.f32.mrb[0].mxu0
        %v428 = vpop.f32.mrb[0].mxu0
        %v429 = vpop.f32.mrb[0].mxu0
        %430 = vdwg.mxu0
        %v431 = vadd.f32 %v381, %v426
        %432 = vst.msk [vmem:[#allocation4] sm:$0xff] %vm303, %v431
        %433 = vst.msk [vmem:[#allocation2] sm:$0xff] %vm373, %v355
        // Predicated region
        $region49: #{tpu_custom_call.1} parent=31 // pred_check
          %p434 = pneg %p288
        $region50: #{tpu_custom_call.1} parent=31 // pred_check_branch
          %436 = sbr.rel (%p434) target = $region52
        $region51: #{tpu_custom_call.1} parent=31 // pred_region
          %v437 = vld [vmem:[#allocation3] sm:$0xff]
          %v438 = vrcp.pop %v437
          %v439 = vld [vmem:[#allocation4] sm:$0xff]
          %441 = vset.pattern.permute.xlu0 0
          %442 = vperm.xlu0 %441, %v438
          %v443 = vpop.permute.xlu0 %442
          %v445 = vmul.f32 %v439, %v443
          %446 = vst.msk [vmem:[%s286] sm:$0xff] %vm303, %v445
        $region52: #{tpu_custom_call.1} parent=31 // pred_fallthru
          _
        %s447 = sand.u32 %s136, 1
        %s448 = scalar_lea.sflag [#allocation7], %s447
        %s449 = sand.u32 %s136, 1
        %s450 = smul.addr %s449, 8
        %s451 = scalar_lea.vmem [#allocation11], %s450
        // Predicated region
        $region53: #{tpu_custom_call.1} parent=31 // pred_check
          %p452 = pneg %p146
        $region54: #{tpu_custom_call.1} parent=31 // pred_check_branch
          %454 = sbr.rel (%p452) target = $region56
        $region55: #{tpu_custom_call.1} parent=31 // pred_region
          %s456 = ssub.s32 128, 128
          %457 = vsyncadd %s448, %s456
          %s458 = sadd.s32 %s29, %s28
          %s459 = smul.addr %s458, 128
          %s460 = scalar_lea.hbm %s3, %s459
          %s462 = sshll.u32 %s451, 4
          %s463 = int_to_ptr.vmem [resolvable:$true] %s462
          %465 = dma.vmem_to_hbm [thread:$0]  %s463, 128, %s460, %s448
        $region56: #{tpu_custom_call.1} parent=31 // pred_fallthru
          _
      $region32: #{tpu_custom_call.1} parent=5 // pred_fallthru
        _
      %p466 = scmp.le.s32.totalorder 2, %s18
      // Predicated region
      $region57: #{tpu_custom_call.1} parent=5 // pred_check
        %p467 = pneg %p466
      $region58: #{tpu_custom_call.1} parent=5 // pred_check_branch
        %469 = sbr.rel (%p467) target = $region60
      $region59: #{tpu_custom_call.1} parent=5 // pred_region
        %s470 = ssub.s32 %s18, 2
        // Predicated region
        $region61: #{tpu_custom_call.1} parent=59 // pred_check
          %p471 = pneg %p152
        $region62: #{tpu_custom_call.1} parent=59 // pred_check_branch
          %473 = sbr.rel (%p471) target = $region64
        $region63: #{tpu_custom_call.1} parent=59 // pred_region
          %s474 = sand.u32 %s137, 1
          %s475 = scalar_lea.sflag [#allocation7], %s474
          %s476 = sand.u32 %s137, 1
          %s477 = smul.addr %s476, 8
          %s478 = scalar_lea.vmem [#allocation11], %s477
          %479 = dma.done %s475, 128
        $region64: #{tpu_custom_call.1} parent=59 // pred_fallthru
          _
      $region60: #{tpu_custom_call.1} parent=5 // pred_fallthru
        _
    $region6: #{tpu_custom_call.1} parent=1 // loop_footer
      %s22 = sadd.s32 1, %s18
    $region7: #{tpu_custom_call.1} parent=1 // loop_footer_branch
      %17 = sbr.rel target = $region3
    $region8: #{tpu_custom_call.1} parent=1 // loop_exit
      _
    %480 = vsyncpa [#allocation6], 1
    %s481 = scalar_lea.sflag [#allocation6], 1
    %482 = vsyncpa %s481, 1
    %483 = vsyncpa [#allocation9], 1
    %s484 = scalar_lea.sflag [#allocation9], 1
    %485 = vsyncpa %s484, 1
    %486 = vsyncpa [#allocation7], 1
    %s487 = scalar_lea.sflag [#allocation7], 1
    %488 = vsyncpa %s487, 1

</llo_original>
